<compile_context>
chip_gen: v7x
topology: tpu7x:2x2x1
jax: 0.10.0
libtpu: 0.0.40
codegen_flags: <defaults>
</compile_context>

<pallas_src>
import functools

import jax
import jax.numpy as jnp
from jax.experimental import pallas as pl
from jax.experimental.pallas import tpu as pltpu


# ----------------------------------------------------------------------------
# small helpers
# ----------------------------------------------------------------------------
def _round_up(x, m):
    return ((x + m - 1) // m) * m


def _pad_to(a, shape):
    pads = [(0, s - d) for d, s in zip(a.shape, shape)]
    if all(p == (0, 0) for p in pads):
        return a
    return jnp.pad(a, pads)


# ----------------------------------------------------------------------------
# Tiled matmul + bias kernel:  (M, K) @ (K, N) + b  ->  (M, N)   (f32 accumulation)
# Used for the hoisted input-to-hidden GEMM and for the decoder.
# ----------------------------------------------------------------------------
def _matmul_bias_kernel(x_ref, w_ref, b_ref, o_ref, acc_ref):
    @pl.when(pl.program_id(2) == 0)
    def _():
        acc_ref[...] = jnp.zeros_like(acc_ref)

    acc_ref[...] += jnp.dot(x_ref[...], w_ref[...],
                            preferred_element_type=jnp.float32)

    @pl.when(pl.program_id(2) == pl.num_programs(2) - 1)
    def _():
        o_ref[...] = (acc_ref[...] + b_ref[...]).astype(o_ref.dtype)


def matmul_bias(x, w, b, *, bm=256, bn=512, bk=512, out_dtype=jnp.float32):
    """x: (M, K); w: (K, N); b: (N,) or (1, N).  Returns f32/out_dtype (M, N)."""
    M, K = x.shape
    K2, N = w.shape
    assert K == K2
    b = b.reshape(1, -1)

    bm = min(bm, _round_up(M, 8))
    bn = min(bn, _round_up(N, 128))
    bk = min(bk, _round_up(K, 128))
    Mp = _round_up(M, bm)
    Np = _round_up(N, bn)
    Kp = _round_up(K, bk)

    xp = _pad_to(x, (Mp, Kp))
    wp = _pad_to(w, (Kp, Np))
    bp = _pad_to(b, (1, Np)).astype(jnp.float32)

    grid = (Mp // bm, Np // bn, Kp // bk)
    out = pl.pallas_call(
        _matmul_bias_kernel,
        out_shape=jax.ShapeDtypeStruct((Mp, Np), out_dtype),
        grid_spec=pltpu.PrefetchScalarGridSpec(
            num_scalar_prefetch=0,
            grid=grid,
            in_specs=[
                pl.BlockSpec((bm, bk), lambda i, j, k: (i, k)),
                pl.BlockSpec((bk, bn), lambda i, j, k: (k, j)),
                pl.BlockSpec((1, bn), lambda i, j, k: (0, j)),
            ],
            out_specs=pl.BlockSpec((bm, bn), lambda i, j, k: (i, j)),
            scratch_shapes=[pltpu.VMEM((bm, bn), jnp.float32)],
        ),
        compiler_params=pltpu.CompilerParams(
            dimension_semantics=("parallel", "parallel", "arbitrary")),
    )(xp, wp, bp)
    return out[:M, :N]


# ----------------------------------------------------------------------------
# LSTM recurrence kernel.
#   grid = (batch_blocks, time_blocks); time is sequential ("arbitrary"),
#   batch blocks are independent ("parallel" -> megacore on v7x).
#   Each grid step processes TT timesteps with an unrolled fori_loop.
#   gates(t) = GX[t] + h_prev @ W_hh^T     (GX precomputed, bias already folded in)
# ----------------------------------------------------------------------------
def _lstm_rec_kernel(gx_ref, whh_ref, h0_ref, c0_ref,
                     y_ref, hout_ref, cout_ref,
                     h_sc, c_sc, *, tt, hp, t_valid, mask_time):
    t_blk = pl.program_id(1)

    @pl.when(t_blk == 0)
    def _():
        h_sc[...] = h0_ref[...]
        c_sc[...] = c0_ref[...]

    whh = whh_ref[...]                       # (Hp, 4*Hp), resident, bf16

    def step(j, carry):
        h_prev, c_prev = carry               # (TB, Hp) f32
        gates = gx_ref[j] + jnp.dot(h_prev.astype(whh.dtype), whh,
                                    preferred_element_type=jnp.float32)
        # gate order i, f, g, o (torch.nn.LSTM); slices are 128-aligned (hp % 128 == 0)
        i_g = jax.nn.sigmoid(gates[:, 0 * hp:1 * hp])
        f_g = jax.nn.sigmoid(gates[:, 1 * hp:2 * hp])
        g_g = jnp.tanh(gates[:, 2 * hp:3 * hp])
        o_g = jax.nn.sigmoid(gates[:, 3 * hp:4 * hp])
        c_new = f_g * c_prev + i_g * g_g
        h_new = o_g * jnp.tanh(c_new)
        if mask_time:                        # only traced when T % TT != 0
            valid = (t_blk * tt + j) < t_valid
            h_new = jnp.where(valid, h_new, h_prev)
            c_new = jnp.where(valid, c_new, c_prev)
        y_ref[j] = h_new.astype(y_ref.dtype)
        return h_new, c_new

    h_f, c_f = jax.lax.fori_loop(0, tt, step, (h_sc[...], c_sc[...]),
                                 unroll=True)
    h_sc[...] = h_f
    c_sc[...] = c_f

    # final hidden state: write only once, on the last time block
    @pl.when(t_blk == pl.num_programs(1) - 1)
    def _():
        hout_ref[...] = h_f
        cout_ref[...] = c_f


def lstm_layer(x, w_ih_t, w_hh_t, bias, h0, c0, *, block_t=8, block_b=256):
    """One LSTM layer (eval mode).

    x:       (T, B, Din)   activations (any float dtype)
    w_ih_t:  (Din, 4*Hp)   gate-padded, bf16
    w_hh_t:  (Hp, 4*Hp)    gate-padded, bf16
    bias:    (1, 4*Hp)     b_ih + b_hh, f32
    h0, c0:  (B, H)        f32
    Returns  y (T, B, H) bf16, h_n (B, H) f32, c_n (B, H) f32.
    """
    T, B, Din = x.shape
    H = h0.shape[1]
    Hp4 = w_ih_t.shape[1]
    Hp = Hp4 // 4

    # 1) hoisted input-to-hidden GEMM (bias folded in), MXU-friendly M = T*B
    gx2d = matmul_bias(x.reshape(T * B, Din).astype(w_ih_t.dtype),
                       w_ih_t, bias, out_dtype=jnp.float32)
    gx = gx2d.reshape(T, B, Hp4)

    # 2) pad batch / time to tile-friendly sizes
    TT = min(block_t, T)
    Tp = _round_up(T, TT)
    Bp = _round_up(B, 16)
    TB = min(_round_up(block_b, 16), Bp)
    Bp = _round_up(Bp, TB)

    gx = _pad_to(gx, (Tp, Bp, Hp4))
    h0p = _pad_to(h0.astype(jnp.float32), (Bp, Hp))
    c0p = _pad_to(c0.astype(jnp.float32), (Bp, Hp))

    nb = Bp // TB
    nt = Tp // TT

    kernel = functools.partial(_lstm_rec_kernel, tt=TT, hp=Hp,
                               t_valid=T, mask_time=(Tp != T))

    grid_spec = pltpu.PrefetchScalarGridSpec(
        num_scalar_prefetch=0,
        grid=(nb, nt),
        in_specs=[
            pl.BlockSpec((TT, TB, Hp4), lambda b, t: (t, b, 0)),   # GX time/batch block
            pl.BlockSpec((Hp, Hp4), lambda b, t: (0, 0)),          # W_hh^T (resident)
            pl.BlockSpec((TB, Hp), lambda b, t: (b, 0)),           # h0 block
            pl.BlockSpec((TB, Hp), lambda b, t: (b, 0)),           # c0 block
        ],
        out_specs=[
            pl.BlockSpec((TT, TB, Hp), lambda b, t: (t, b, 0)),    # per-step outputs
            pl.BlockSpec((TB, Hp), lambda b, t: (b, 0)),           # final h
            pl.BlockSpec((TB, Hp), lambda b, t: (b, 0)),           # final c
        ],
        scratch_shapes=[
            pltpu.VMEM((TB, Hp), jnp.float32),                     # h carry
            pltpu.VMEM((TB, Hp), jnp.float32),                     # c carry
        ],
    )

    y, h_n, c_n = pl.pallas_call(
        kernel,
        grid_spec=grid_spec,
        out_shape=(
            jax.ShapeDtypeStruct((Tp, Bp, Hp), w_hh_t.dtype),
            jax.ShapeDtypeStruct((Bp, Hp), jnp.float32),
            jax.ShapeDtypeStruct((Bp, Hp), jnp.float32),
        ),
        compiler_params=pltpu.CompilerParams(
            dimension_semantics=("parallel", "arbitrary")),
    )(gx, w_hh_t, h0p, c0p)

    return y[:T, :B, :H], h_n[:B, :H], c_n[:B, :H]


# ----------------------------------------------------------------------------
# Full model forward (eval mode)
# ----------------------------------------------------------------------------
def rnn_model_forward(params, tokens, hidden, *, block_t=8):
    """tokens: (T, B) int32; hidden: list of (h, c) per layer.

    Returns (result, new_hidden, gate_value, total_kl_loss) like RNNModel.forward.
    """
    # TODO(synk): embedding lookup is a data-dependent gather; kept as plain-JAX jnp.take
    # (a Pallas DMA-gather adds no value at these sizes).
    emb = jnp.take(params["encoder"], tokens, axis=0)          # (T, B, ninp) f32

    raw_output = emb
    new_hidden = []
    for layer_p, (h0, c0) in zip(params["layers"], hidden):
        raw_output, h_n, c_n = lstm_layer(
            raw_output, layer_p["w_ih_t"], layer_p["w_hh_t"],
            layer_p["bias"], h0, c0, block_t=block_t)
        new_hidden.append((h_n, c_n))
    # dropoute/dropouti/dropouth/dropout/wdrop are identity in eval mode.

    T, B, H = raw_output.shape
    decoded = matmul_bias(raw_output.reshape(T * B, H).astype(params["dec_w_t"].dtype),
                          params["dec_w_t"], params["dec_b"],
                          out_dtype=jnp.float32)
    result = decoded.reshape(T, B, -1)

    gate_value = ()                           # plain LSTM cell exposes no gate values
    total_kl_loss = jnp.array(0.0, jnp.float32)
    return result, new_hidden, gate_value, total_kl_loss


# ----------------------------------------------------------------------------
# Deterministic parameter init (shapes follow the module's __init__).
# Weights are pre-transposed, per-gate padded to Hp = round_up(nhid, 128), and cast to
# bf16 for the MXU; biases (b_ih + b_hh) stay f32 and are folded into the input GEMM.
# ----------------------------------------------------------------------------
def init_params(key, ntoken, ninp, nhid, nlayers, param_dtype=jnp.bfloat16):
    ks = jax.random.split(key, 2 + 4 * nlayers)
    initrange = 0.1
    Hp = _round_up(nhid, 128)

    params = {
        "encoder": jax.random.uniform(ks[0], (ntoken, ninp), jnp.float32,
                                      -initrange, initrange),
        "dec_w_t": jax.random.uniform(ks[1], (nhid, ntoken), jnp.float32,
                                      -initrange, initrange).astype(param_dtype),
        "dec_b": jnp.zeros((1, ntoken), jnp.float32),
        "layers": [],
    }
    for l in range(nlayers):
        din = ninp if l == 0 else nhid
        H = nhid                                  # tie_weights=False -> all layers nhid
        stdv = 1.0 / (H ** 0.5)
        k0, k1, k2, k3 = ks[2 + 4 * l: 2 + 4 * (l + 1)]
        w_ih = jax.random.uniform(k0, (4 * H, din), jnp.float32, -stdv, stdv)
        w_hh = jax.random.uniform(k1, (4 * H, H), jnp.float32, -stdv, stdv)
        b_ih = jax.random.uniform(k2, (4 * H,), jnp.float32, -stdv, stdv)
        b_hh = jax.random.uniform(k3, (4 * H,), jnp.float32, -stdv, stdv)

        # transpose + per-gate pad H -> Hp so gate slices are 128-aligned in the kernel
        w_ih_t = w_ih.T.reshape(din, 4, H)
        w_ih_t = jnp.pad(w_ih_t, ((0, 0), (0, 0), (0, Hp - H))).reshape(din, 4 * Hp)
        w_hh_t = w_hh.T.reshape(H, 4, H)
        w_hh_t = jnp.pad(w_hh_t, ((0, Hp - H), (0, 0), (0, Hp - H))).reshape(Hp, 4 * Hp)
        bias = (b_ih + b_hh).reshape(4, H)
        bias = jnp.pad(bias, ((0, 0), (0, Hp - H))).reshape(1, 4 * Hp)

        params["layers"].append({
            "w_ih_t": w_ih_t.astype(param_dtype),     # (din, 4*Hp)
            "w_hh_t": w_hh_t.astype(param_dtype),     # (Hp, 4*Hp)
            "bias": bias.astype(jnp.float32),         # (1, 4*Hp)
        })
    return params


def init_hidden(bsz, nhid, nlayers):
    return [(jnp.zeros((bsz, nhid), jnp.float32),
             jnp.zeros((bsz, nhid), jnp.float32)) for _ in range(nlayers)]


if __name__ == "__main__":
    ntoken, ninp, nhid, nlayers = 100, 32, 32, 2
    seq, batch = 8, 2

    key = jax.random.PRNGKey(0)
    kp, kt = jax.random.split(key)
    params = init_params(kp, ntoken, ninp, nhid, nlayers)
    tokens = jax.random.randint(kt, (seq, batch), 0, ntoken, dtype=jnp.int32)
    hidden = init_hidden(batch, nhid, nlayers)

    result, new_hidden, gate_value, kl_loss = rnn_model_forward(params, tokens, hidden)
    jax.block_until_ready(result)
    jax.block_until_ready(new_hidden)

    assert result.shape == (seq, batch, ntoken)
    assert new_hidden[0][0].shape == (batch, nhid)
    assert new_hidden[-1][1].shape == (batch, nhid)
    print("KERNEL_OK")
</pallas_src>

<mosaic_0001>
module attributes {stable_mosaic.version = 11 : i64} {
  func.func @_matmul_bias_kernel(%arg0: i32, %arg1: i32, %arg2: i32, %arg3: memref<16x128xbf16, #tpu.memory_space<vmem>>, %arg4: memref<128x512xbf16, #tpu.memory_space<vmem>>, %arg5: memref<1x512xf32, #tpu.memory_space<vmem>>, %arg6: memref<16x512xf32, #tpu.memory_space<vmem>>, %arg7: memref<16x512xf32, #tpu.memory_space<vmem>>) attributes {dimension_semantics = [#tpu.dimension_semantics<parallel>, #tpu.dimension_semantics<parallel>, #tpu.dimension_semantics<arbitrary>], iteration_bounds = array<i64: 1, 1, 1>, scalar_prefetch = 0 : i64, scratch_operands = 1 : i64, tpu.core_type = #tpu.core_type<tc>, window_params = [{transform_indices = @transform_0, window_bounds = array<i64: 16, 128>}, {transform_indices = @transform_1, window_bounds = array<i64: 128, 512>}, {transform_indices = @transform_2, window_bounds = array<i64: 1, 512>}, {transform_indices = @transform_3, window_bounds = array<i64: 16, 512>}]} {
    %c0_i32 = arith.constant 0 : i32
    %0 = arith.cmpi eq, %arg2, %c0_i32 : i32
    %1 = arith.extui %0 : i1 to i32
    %c0_i32_0 = arith.constant 0 : i32
    %2 = arith.cmpi ne, %1, %c0_i32_0 : i32
    scf.if %2 {
      %cst_10 = arith.constant 0.000000e+00 : f32
      %12 = vector.broadcast %cst_10 : f32 to vector<16x512xf32>
      %c0_11 = arith.constant 0 : index
      %c0_12 = arith.constant 0 : index
      %13 = vector.load %arg7[%c0_11, %c0_12] : memref<16x512xf32, #tpu.memory_space<vmem>>, vector<16x512xf32>
      tpu.vector_store %arg7[%c0_11, %c0_12], %12 {strides = array<i32>} : memref<16x512xf32, #tpu.memory_space<vmem>>, vector<16x512xf32>,
    } else {
    }
    %c0 = arith.constant 0 : index
    %c0_1 = arith.constant 0 : index
    %3 = vector.load %arg7[%c0, %c0_1] : memref<16x512xf32, #tpu.memory_space<vmem>>, vector<16x512xf32>
    %c0_2 = arith.constant 0 : index
    %c0_3 = arith.constant 0 : index
    %4 = vector.load %arg3[%c0_2, %c0_3] : memref<16x128xbf16, #tpu.memory_space<vmem>>, vector<16x128xbf16>
    %c0_4 = arith.constant 0 : index
    %c0_5 = arith.constant 0 : index
    %5 = vector.load %arg4[%c0_4, %c0_5] : memref<128x512xbf16, #tpu.memory_space<vmem>>, vector<128x512xbf16>
    %cst = arith.constant dense<0.000000e+00> : vector<16x512xf32>
    %6 = tpu.matmul %4, %5, %cst {dimension_numbers = #tpu.dot_dimension_numbers<[1], [0], [0], [1], [0, 0, 1, 1], [], []>} : vector<16x128xbf16>, vector<128x512xbf16>, vector<16x512xf32> -> vector<16x512xf32>
    %7 = arith.addf %3, %6 : vector<16x512xf32>
    %c0_6 = arith.constant 0 : index
    %c0_7 = arith.constant 0 : index
    %8 = vector.load %arg7[%c0_6, %c0_7] : memref<16x512xf32, #tpu.memory_space<vmem>>, vector<16x512xf32>
    tpu.vector_store %arg7[%c0_6, %c0_7], %7 {strides = array<i32>} : memref<16x512xf32, #tpu.memory_space<vmem>>, vector<16x512xf32>,
    %c0_i32_8 = arith.constant 0 : i32
    %9 = arith.cmpi eq, %arg2, %c0_i32_8 : i32
    %10 = arith.extui %9 : i1 to i32
    %c0_i32_9 = arith.constant 0 : i32
    %11 = arith.cmpi ne, %10, %c0_i32_9 : i32
    scf.if %11 {
      %c0_10 = arith.constant 0 : index
      %c0_11 = arith.constant 0 : index
      %12 = vector.load %arg7[%c0_10, %c0_11] : memref<16x512xf32, #tpu.memory_space<vmem>>, vector<16x512xf32>
      %c0_12 = arith.constant 0 : index
      %c0_13 = arith.constant 0 : index
      %13 = vector.load %arg5[%c0_12, %c0_13] : memref<1x512xf32, #tpu.memory_space<vmem>>, vector<1x512xf32>
      %14 = vector.broadcast %13 : vector<1x512xf32> to vector<16x512xf32>
      %15 = arith.addf %12, %14 : vector<16x512xf32>
      %c0_14 = arith.constant 0 : index
      %c0_15 = arith.constant 0 : index
      %16 = vector.load %arg6[%c0_14, %c0_15] : memref<16x512xf32, #tpu.memory_space<vmem>>, vector<16x512xf32>
      tpu.vector_store %arg6[%c0_14, %c0_15], %15 {strides = array<i32>} : memref<16x512xf32, #tpu.memory_space<vmem>>, vector<16x512xf32>,
    } else {
    }
    return
  }
  func.func @transform_0(%arg0: i32, %arg1: i32, %arg2: i32) -> (i32, i32) {
    %c0_i32 = arith.constant 0 : i32
    return %arg0, %arg2 : i32, i32
  }
  func.func @transform_1(%arg0: i32, %arg1: i32, %arg2: i32) -> (i32, i32) {
    %c0_i32 = arith.constant 0 : i32
    return %arg2, %arg1 : i32, i32
  }
  func.func @transform_2(%arg0: i32, %arg1: i32, %arg2: i32) -> (i32, i32) {
    %c0_i32 = arith.constant 0 : i32
    %c0_i32_0 = arith.constant 0 : i32
    return %c0_i32, %arg1 : i32, i32
  }
  func.func @transform_3(%arg0: i32, %arg1: i32, %arg2: i32) -> (i32, i32) {
    %c0_i32 = arith.constant 0 : i32
    return %arg0, %arg1 : i32, i32
  }
}

</mosaic_0001>

<llo_original>
// kernel: tpu_custom_call.1
$region0: #{tpu_custom_call.1}
  #allocation0 [shape = 'u32[]', space=smem, size = 0x4, offset = 0x4, fixed_abs, tag = 'smem constant byte address 0x4 - core index']
  #allocation1 [shape = 'u32[144,128]{1,0:T(1,128)}', space=vmem, size = 0x12000, scoped, tag = 'internal scratch']
  #allocation2 [shape = 'f32[16,512]{1,0:T(8,128)}', space=vmem, size = 0x8000, scoped, tag = 'scratch operand']
  %s0 = inlined_call_operand.hbm [shape: bf16[16,128], index: 0, kind: input, shape index: {}]
  %s1 = inlined_call_operand.hbm [shape: bf16[128,512], index: 1, kind: input, shape index: {}]
  %s2 = inlined_call_operand.vmem [shape: f32[1,512], index: 2, kind: input, shape index: {}]
  %s3 = inlined_call_operand.hbm [shape: f32[16,512], index: 3, kind: output, shape index: {}]
  %s4 = sld [smem:[#allocation0]]
  $region38: #{tpu_custom_call.1} parent=0
    _
  %s6 = ssub.s32 1, %s4
  %s7 = scalar_select 0, %s6, %s4
  $region1: #{tpu_custom_call.1} parent=0
    #allocation3 [shape = 'u8[4096]{0}', space=vmem, size = 0x1000, scoped, tag = 'input window, operand 0, single buffered']
    #allocation4 [shape = 's32[1]{0}', space=sflag, size = 0x4, scoped, tag = 'scoped memory for tpu_custom_call.1']
    #allocation5 [shape = 's32[1]{0}', space=sflag, size = 0x4, scoped, tag = 'scoped memory for tpu_custom_call.1']
    #allocation6 [shape = 'u8[131072]{0}', space=vmem, size = 0x20000, scoped, tag = 'input window, operand 1, single buffered']
    #allocation7 [shape = 's32[1]{0}', space=sflag, size = 0x4, scoped, tag = 'scoped memory for tpu_custom_call.1']
    #allocation8 [shape = 'u8[32768]{0}', space=vmem, size = 0x8000, scoped, tag = 'output window, operand 0, single buffered']
    %8 = vsyncpa [#allocation4], 0
    %9 = vsyncpa [#allocation7], 0
    %10 = vsyncpa [#allocation5], 0
    // Predicated region
    $region2: #{tpu_custom_call.1} parent=1 // pred_check
      _
    $region3: #{tpu_custom_call.1} parent=1 // pred_check_branch
      %12 = sbr.rel (0) target = $region5
    $region4: #{tpu_custom_call.1} parent=1 // pred_region
      %s14 = ssub.s32 128, 128
      %15 = vsyncadd [#allocation4], %s14
      %s16 = sshll.u32 [#allocation3], 4
      %s17 = int_to_ptr.vmem [resolvable:$true] %s16
      %22 = dma.hbm_to_vmem [thread:$0]  %s0, 128, %s17, [#allocation4], 64, 64, 4
    $region5: #{tpu_custom_call.1} parent=1 // pred_fallthru
      _
    // Predicated region
    $region6: #{tpu_custom_call.1} parent=1 // pred_check
      _
    $region7: #{tpu_custom_call.1} parent=1 // pred_check_branch
      %24 = sbr.rel (0) target = $region9
    $region8: #{tpu_custom_call.1} parent=1 // pred_region
      %s26 = ssub.s32 4096, 4096
      %27 = vsyncadd [#allocation7], %s26
      %s28 = sshll.u32 [#allocation6], 4
      %s29 = int_to_ptr.vmem [resolvable:$true] %s28
      %34 = dma.hbm_to_vmem [thread:$0]  %s1, 4096, %s29, [#allocation7], 256, 256, 16
    $region9: #{tpu_custom_call.1} parent=1 // pred_fallthru
      _
    // Predicated region
    $region10: #{tpu_custom_call.1} parent=1 // pred_check
      _
    $region11: #{tpu_custom_call.1} parent=1 // pred_check_branch
      %36 = sbr.rel (0) target = $region13
    $region12: #{tpu_custom_call.1} parent=1 // pred_region
      _
    $region13: #{tpu_custom_call.1} parent=1 // pred_fallthru
      _
    // Predicated region
    $region14: #{tpu_custom_call.1} parent=1 // pred_check
      _
    $region15: #{tpu_custom_call.1} parent=1 // pred_check_branch
      %38 = sbr.rel (0) target = $region17
    $region16: #{tpu_custom_call.1} parent=1 // pred_region
      %39 = dma.done [#allocation4], 128
    $region17: #{tpu_custom_call.1} parent=1 // pred_fallthru
      _
    // Predicated region
    $region18: #{tpu_custom_call.1} parent=1 // pred_check
      _
    $region19: #{tpu_custom_call.1} parent=1 // pred_check_branch
      %41 = sbr.rel (0) target = $region21
    $region20: #{tpu_custom_call.1} parent=1 // pred_region
      %42 = dma.done [#allocation7], 4096
    $region21: #{tpu_custom_call.1} parent=1 // pred_fallthru
      _
    %p44 = scmp.eq.s32.totalorder 0, 0
    // Predicated region
    $region22: #{tpu_custom_call.1} parent=1 // pred_check
      %p45 = pneg %p44
    $region23: #{tpu_custom_call.1} parent=1 // pred_check_branch
      %47 = sbr.rel (%p45) target = $region25
    $region24: #{tpu_custom_call.1} parent=1 // pred_region
      %48 = vst [vmem:[#allocation2] sm:$0xff] 0.0
      %49 = vst [vmem:[#allocation2 + $0x8] sm:$0xff] 0.0
      %50 = vst [vmem:[#allocation2 + $0x10] sm:$0xff] 0.0
      %51 = vst [vmem:[#allocation2 + $0x18] sm:$0xff] 0.0
      %52 = vst [vmem:[#allocation2 + $0x20] sm:$0xff] 0.0
      %53 = vst [vmem:[#allocation2 + $0x28] sm:$0xff] 0.0
      %54 = vst [vmem:[#allocation2 + $0x30] sm:$0xff] 0.0
      %55 = vst [vmem:[#allocation2 + $0x38] sm:$0xff] 0.0
    $region25: #{tpu_custom_call.1} parent=1 // pred_fallthru
      _
    %v56 = vld [vmem:[#allocation2] sm:$0xff]
    %v57 = vld [vmem:[#allocation2 + $0x8] sm:$0xff]
    %v58 = vld [vmem:[#allocation2 + $0x10] sm:$0xff]
    %v59 = vld [vmem:[#allocation2 + $0x18] sm:$0xff]
    %v60 = vld [vmem:[#allocation2 + $0x20] sm:$0xff]
    %v61 = vld [vmem:[#allocation2 + $0x28] sm:$0xff]
    %v62 = vld [vmem:[#allocation2 + $0x30] sm:$0xff]
    %v63 = vld [vmem:[#allocation2 + $0x38] sm:$0xff]
    %v64 = vld [vmem:[#allocation3] sm:$0xf]
    %v65 = vld [vmem:[#allocation3 + $0x4] sm:$0xf]
    %v66 = vld [vmem:[#allocation6] sm:$0xff]
    %v67 = vld [vmem:[#allocation6 + $0x8] sm:$0xff]
    %v68 = vld [vmem:[#allocation6 + $0x10] sm:$0xff]
    %v69 = vld [vmem:[#allocation6 + $0x18] sm:$0xff]
    %v70 = vld [vmem:[#allocation6 + $0x20] sm:$0xff]
    %v71 = vld [vmem:[#allocation6 + $0x28] sm:$0xff]
    %v72 = vld [vmem:[#allocation6 + $0x30] sm:$0xff]
    %v73 = vld [vmem:[#allocation6 + $0x38] sm:$0xff]
    %v74 = vld [vmem:[#allocation6 + $0x40] sm:$0xff]
    %v75 = vld [vmem:[#allocation6 + $0x48] sm:$0xff]
    %v76 = vld [vmem:[#allocation6 + $0x50] sm:$0xff]
    %v77 = vld [vmem:[#allocation6 + $0x58] sm:$0xff]
    %v78 = vld [vmem:[#allocation6 + $0x60] sm:$0xff]
    %v79 = vld [vmem:[#allocation6 + $0x68] sm:$0xff]
    %v80 = vld [vmem:[#allocation6 + $0x70] sm:$0xff]
    %v81 = vld [vmem:[#allocation6 + $0x78] sm:$0xff]
    %v82 = vld [vmem:[#allocation6 + $0x80] sm:$0xff]
    %v83 = vld [vmem:[#allocation6 + $0x88] sm:$0xff]
    %v84 = vld [vmem:[#allocation6 + $0x90] sm:$0xff]
    %v85 = vld [vmem:[#allocation6 + $0x98] sm:$0xff]
    %v86 = vld [vmem:[#allocation6 + $0xa0] sm:$0xff]
    %v87 = vld [vmem:[#allocation6 + $0xa8] sm:$0xff]
    %v88 = vld [vmem:[#allocation6 + $0xb0] sm:$0xff]
    %v89 = vld [vmem:[#allocation6 + $0xb8] sm:$0xff]
    %v90 = vld [vmem:[#allocation6 + $0xc0] sm:$0xff]
    %v91 = vld [vmem:[#allocation6 + $0xc8] sm:$0xff]
    %v92 = vld [vmem:[#allocation6 + $0xd0] sm:$0xff]
    %v93 = vld [vmem:[#allocation6 + $0xd8] sm:$0xff]
    %v94 = vld [vmem:[#allocation6 + $0xe0] sm:$0xff]
    %v95 = vld [vmem:[#allocation6 + $0xe8] sm:$0xff]
    %v96 = vld [vmem:[#allocation6 + $0xf0] sm:$0xff]
    %v97 = vld [vmem:[#allocation6 + $0xf8] sm:$0xff]
    %v100 = vunpack.c.l.b16 %v64
    %v101 = vunpack.c.l.b16 %v65
    %v102 = vpack.c.b16 %v101, %v100
    %v136 = vunpack.c.l.b16 %v66
    %v137 = vunpack.c.h.b16 %v66
    %v138 = vunpack.c.l.b16 %v67
    %v139 = vunpack.c.h.b16 %v67
    %v140 = vunpack.c.l.b16 %v68
    %v141 = vunpack.c.h.b16 %v68
    %v142 = vunpack.c.l.b16 %v69
    %v143 = vunpack.c.h.b16 %v69
    %v144 = vunpack.c.l.b16 %v70
    %v145 = vunpack.c.h.b16 %v70
    %v146 = vunpack.c.l.b16 %v71
    %v147 = vunpack.c.h.b16 %v71
    %v148 = vunpack.c.l.b16 %v72
    %v149 = vunpack.c.h.b16 %v72
    %v150 = vunpack.c.l.b16 %v73
    %v151 = vunpack.c.h.b16 %v73
    %v152 = vunpack.c.l.b16 %v74
    %v153 = vunpack.c.h.b16 %v74
    %v154 = vunpack.c.l.b16 %v75
    %v155 = vunpack.c.h.b16 %v75
    %v156 = vunpack.c.l.b16 %v76
    %v157 = vunpack.c.h.b16 %v76
    %v158 = vunpack.c.l.b16 %v77
    %v159 = vunpack.c.h.b16 %v77
    %v160 = vunpack.c.l.b16 %v78
    %v161 = vunpack.c.h.b16 %v78
    %v162 = vunpack.c.l.b16 %v79
    %v163 = vunpack.c.h.b16 %v79
    %v164 = vunpack.c.l.b16 %v80
    %v165 = vunpack.c.h.b16 %v80
    %v166 = vunpack.c.l.b16 %v81
    %v167 = vunpack.c.h.b16 %v81
    %v168 = vunpack.c.l.b16 %v82
    %v169 = vunpack.c.h.b16 %v82
    %v170 = vunpack.c.l.b16 %v83
    %v171 = vunpack.c.h.b16 %v83
    %v172 = vunpack.c.l.b16 %v84
    %v173 = vunpack.c.h.b16 %v84
    %v174 = vunpack.c.l.b16 %v85
    %v175 = vunpack.c.h.b16 %v85
    %v176 = vunpack.c.l.b16 %v86
    %v177 = vunpack.c.h.b16 %v86
    %v178 = vunpack.c.l.b16 %v87
    %v179 = vunpack.c.h.b16 %v87
    %v180 = vunpack.c.l.b16 %v88
    %v181 = vunpack.c.h.b16 %v88
    %v182 = vunpack.c.l.b16 %v89
    %v183 = vunpack.c.h.b16 %v89
    %v184 = vunpack.c.l.b16 %v90
    %v185 = vunpack.c.h.b16 %v90
    %v186 = vunpack.c.l.b16 %v91
    %v187 = vunpack.c.h.b16 %v91
    %v188 = vunpack.c.l.b16 %v92
    %v189 = vunpack.c.h.b16 %v92
    %v190 = vunpack.c.l.b16 %v93
    %v191 = vunpack.c.h.b16 %v93
    %v192 = vunpack.c.l.b16 %v94
    %v193 = vunpack.c.h.b16 %v94
    %v194 = vunpack.c.l.b16 %v95
    %v195 = vunpack.c.h.b16 %v95
    %v196 = vunpack.c.l.b16 %v96
    %v197 = vunpack.c.h.b16 %v96
    %v198 = vunpack.c.l.b16 %v97
    %v199 = vunpack.c.h.b16 %v97
    %v200 = vpack.c.b16 %v140, %v136
    %v201 = vpack.c.b16 %v141, %v137
    %v202 = vpack.c.b16 %v142, %v138
    %v203 = vpack.c.b16 %v143, %v139
    %v204 = vpack.c.b16 %v148, %v144
    %v205 = vpack.c.b16 %v149, %v145
    %v206 = vpack.c.b16 %v150, %v146
    %v207 = vpack.c.b16 %v151, %v147
    %v208 = vpack.c.b16 %v156, %v152
    %v209 = vpack.c.b16 %v157, %v153
    %v210 = vpack.c.b16 %v158, %v154
    %v211 = vpack.c.b16 %v159, %v155
    %v212 = vpack.c.b16 %v164, %v160
    %v213 = vpack.c.b16 %v165, %v161
    %v214 = vpack.c.b16 %v166, %v162
    %v215 = vpack.c.b16 %v167, %v163
    %v216 = vpack.c.b16 %v172, %v168
    %v217 = vpack.c.b16 %v173, %v169
    %v218 = vpack.c.b16 %v174, %v170
    %v219 = vpack.c.b16 %v175, %v171
    %v220 = vpack.c.b16 %v180, %v176
    %v221 = vpack.c.b16 %v181, %v177
    %v222 = vpack.c.b16 %v182, %v178
    %v223 = vpack.c.b16 %v183, %v179
    %v224 = vpack.c.b16 %v188, %v184
    %v225 = vpack.c.b16 %v189, %v185
    %v226 = vpack.c.b16 %v190, %v186
    %v227 = vpack.c.b16 %v191, %v187
    %v228 = vpack.c.b16 %v196, %v192
    %v229 = vpack.c.b16 %v197, %v193
    %v230 = vpack.c.b16 %v198, %v194
    %v231 = vpack.c.b16 %v199, %v195
    %264 = vmatprep.subr.bf16.mxu0 %v201
    %265 = vmatpush1.bf16.msra.mxu0 %v200
    %266 = vmatprep.subr.bf16.mxu0 %v205
    %267 = vmatpush1.bf16.msra.mxu0 %v204
    %268 = vmatprep.subr.bf16.mxu0 %v209
    %269 = vmatpush1.bf16.msra.mxu0 %v208
    %270 = vmatprep.subr.bf16.mxu0 %v213
    %271 = vmatpush1.bf16.msra.mxu0 %v212
    %272 = vmatprep.subr.bf16.mxu0 %v217
    %273 = vmatpush1.bf16.msra.mxu0 %v216
    %274 = vmatprep.subr.bf16.mxu0 %v221
    %275 = vmatpush1.bf16.msra.mxu0 %v220
    %276 = vmatprep.subr.bf16.mxu0 %v225
    %277 = vmatpush1.bf16.msra.mxu0 %v224
    %278 = vmatprep.subr.bf16.mxu0 %v229
    %279 = vmatpush1.bf16.msra.mxu0 %v228
    %280 = vmatprep.subr.bf16.mxu0 0
    %281 = vmatpush1.bf16.msra.mxu0 0
    %282 = vmatprep.subr.bf16.mxu0 0
    %283 = vmatpush1.bf16.msra.mxu0 0
    %284 = vmatprep.subr.bf16.mxu0 0
    %285 = vmatpush1.bf16.msra.mxu0 0
    %286 = vmatprep.subr.bf16.mxu0 0
    %287 = vmatpush1.bf16.msra.mxu0 0
    %288 = vmatprep.subr.bf16.mxu0 0
    %289 = vmatpush1.bf16.msra.mxu0 0
    %290 = vmatprep.subr.bf16.mxu0 0
    %291 = vmatpush1.bf16.msra.mxu0 0
    %292 = vmatprep.subr.bf16.mxu0 0
    %293 = vmatpush1.bf16.msra.mxu0 0
    %294 = vmatprep.subr.bf16.mxu0 0
    %295 = vmatpush1.bf16.msra.mxu0 0
    %296 = vmatprep.mubr.bf16.mxu0 0
    %297 = vmatmul.mubr.bf16.gmra.mrb[0].mxu0 %v102
    %v298 = vpop.f32.mrb[0].mxu0
    %v299 = vadd.f32 0.0, %v298
    %v300 = vpop.f32.mrb[0].mxu0
    %v301 = vadd.f32 0.0, %v300
    %v302 = vpop.f32.mrb[0].mxu0
    %v303 = vadd.f32 0.0, %v302
    %v304 = vpop.f32.mrb[0].mxu0
    %v305 = vadd.f32 0.0, %v304
    %306 = vdwg.mxu0
    %307 = vmatprep.subr.bf16.mxu0 %v203
    %308 = vmatpush1.bf16.msra.mxu0 %v202
    %309 = vmatprep.subr.bf16.mxu0 %v207
    %310 = vmatpush1.bf16.msra.mxu0 %v206
    %311 = vmatprep.subr.bf16.mxu0 %v211
    %312 = vmatpush1.bf16.msra.mxu0 %v210
    %313 = vmatprep.subr.bf16.mxu0 %v215
    %314 = vmatpush1.bf16.msra.mxu0 %v214
    %315 = vmatprep.subr.bf16.mxu0 %v219
    %316 = vmatpush1.bf16.msra.mxu0 %v218
    %317 = vmatprep.subr.bf16.mxu0 %v223
    %318 = vmatpush1.bf16.msra.mxu0 %v222
    %319 = vmatprep.subr.bf16.mxu0 %v227
    %320 = vmatpush1.bf16.msra.mxu0 %v226
    %321 = vmatprep.subr.bf16.mxu0 %v231
    %322 = vmatpush1.bf16.msra.mxu0 %v230
    %323 = vmatprep.subr.bf16.mxu0 0
    %324 = vmatpush1.bf16.msra.mxu0 0
    %325 = vmatprep.subr.bf16.mxu0 0
    %326 = vmatpush1.bf16.msra.mxu0 0
    %327 = vmatprep.subr.bf16.mxu0 0
    %328 = vmatpush1.bf16.msra.mxu0 0
    %329 = vmatprep.subr.bf16.mxu0 0
    %330 = vmatpush1.bf16.msra.mxu0 0
    %331 = vmatprep.subr.bf16.mxu0 0
    %332 = vmatpush1.bf16.msra.mxu0 0
    %333 = vmatprep.subr.bf16.mxu0 0
    %334 = vmatpush1.bf16.msra.mxu0 0
    %335 = vmatprep.subr.bf16.mxu0 0
    %336 = vmatpush1.bf16.msra.mxu0 0
    %337 = vmatprep.subr.bf16.mxu0 0
    %338 = vmatpush1.bf16.msra.mxu0 0
    %339 = vmatprep.mubr.bf16.mxu0 0
    %340 = vmatmul.mubr.bf16.gmra.mrb[0].mxu0 %v102
    %v341 = vpop.f32.mrb[0].mxu0
    %v342 = vadd.f32 0.0, %v341
    %v343 = vpop.f32.mrb[0].mxu0
    %v344 = vadd.f32 0.0, %v343
    %v345 = vpop.f32.mrb[0].mxu0
    %v346 = vadd.f32 0.0, %v345
    %v347 = vpop.f32.mrb[0].mxu0
    %v348 = vadd.f32 0.0, %v347
    %349 = vdwg.mxu0
    %v350 = vadd.f32 %v56, %v299
    %v351 = vadd.f32 %v57, %v301
    %v352 = vadd.f32 %v58, %v342
    %v353 = vadd.f32 %v59, %v344
    %v354 = vadd.f32 %v60, %v303
    %v355 = vadd.f32 %v61, %v305
    %v356 = vadd.f32 %v62, %v346
    %v357 = vadd.f32 %v63, %v348
    %358 = vst [vmem:[#allocation2] sm:$0xff] %v350
    %359 = vst [vmem:[#allocation2 + $0x8] sm:$0xff] %v351
    %360 = vst [vmem:[#allocation2 + $0x10] sm:$0xff] %v352
    %361 = vst [vmem:[#allocation2 + $0x18] sm:$0xff] %v353
    %362 = vst [vmem:[#allocation2 + $0x20] sm:$0xff] %v354
    %363 = vst [vmem:[#allocation2 + $0x28] sm:$0xff] %v355
    %364 = vst [vmem:[#allocation2 + $0x30] sm:$0xff] %v356
    %365 = vst [vmem:[#allocation2 + $0x38] sm:$0xff] %v357
    // Predicated region
    $region26: #{tpu_custom_call.1} parent=1 // pred_check
      %p366 = pneg %p44
    $region27: #{tpu_custom_call.1} parent=1 // pred_check_branch
      %368 = sbr.rel (%p366) target = $region29
    $region28: #{tpu_custom_call.1} parent=1 // pred_region
      %v369 = vld [vmem:[#allocation2] sm:$0xff]
      %v370 = vld [vmem:[#allocation2 + $0x8] sm:$0xff]
      %v371 = vld [vmem:[#allocation2 + $0x10] sm:$0xff]
      %v372 = vld [vmem:[#allocation2 + $0x18] sm:$0xff]
      %v373 = vld [vmem:[#allocation2 + $0x20] sm:$0xff]
      %v374 = vld [vmem:[#allocation2 + $0x28] sm:$0xff]
      %v375 = vld [vmem:[#allocation2 + $0x30] sm:$0xff]
      %v376 = vld [vmem:[#allocation2 + $0x38] sm:$0xff]
      %v377 = vld [vmem:[%s2] sm:$0xf]
      %v379 = vlaneseq
      %v380 = vshrl.u32 %v379, 7
      %v381 = vsub.s32 0, %v380
      %v382 = vrot.slane %v377, %v381
      %v383 = vlaneseq
      %v384 = vshrl.u32 %v383, 7
      %v385 = vsub.s32 1, %v384
      %v386 = vrot.slane %v377, %v385
      %v387 = vlaneseq
      %v388 = vshrl.u32 %v387, 7
      %v389 = vsub.s32 2, %v388
      %v390 = vrot.slane %v377, %v389
      %v391 = vlaneseq
      %v392 = vshrl.u32 %v391, 7
      %v393 = vsub.s32 3, %v392
      %v394 = vrot.slane %v377, %v393
      %v399 = vadd.f32 %v369, %v382
      %v400 = vadd.f32 %v370, %v386
      %v401 = vadd.f32 %v371, %v390
      %v402 = vadd.f32 %v372, %v394
      %v403 = vadd.f32 %v373, %v382
      %v404 = vadd.f32 %v374, %v386
      %v405 = vadd.f32 %v375, %v390
      %v406 = vadd.f32 %v376, %v394
      %407 = vst [vmem:[#allocation8] sm:$0xff] %v399
      %408 = vst [vmem:[#allocation8 + $0x8] sm:$0xff] %v400
      %409 = vst [vmem:[#allocation8 + $0x10] sm:$0xff] %v401
      %410 = vst [vmem:[#allocation8 + $0x18] sm:$0xff] %v402
      %411 = vst [vmem:[#allocation8 + $0x20] sm:$0xff] %v403
      %412 = vst [vmem:[#allocation8 + $0x28] sm:$0xff] %v404
      %413 = vst [vmem:[#allocation8 + $0x30] sm:$0xff] %v405
      %414 = vst [vmem:[#allocation8 + $0x38] sm:$0xff] %v406
    $region29: #{tpu_custom_call.1} parent=1 // pred_fallthru
      _
    // Predicated region
    $region30: #{tpu_custom_call.1} parent=1 // pred_check
      _
    $region31: #{tpu_custom_call.1} parent=1 // pred_check_branch
      %416 = sbr.rel (0) target = $region33
    $region32: #{tpu_custom_call.1} parent=1 // pred_region
      %s418 = ssub.s32 1024, 1024
      %419 = vsyncadd [#allocation5], %s418
      %s420 = sshll.u32 [#allocation8], 4
      %s421 = int_to_ptr.vmem [resolvable:$true] %s420
      %426 = dma.vmem_to_hbm [thread:$0]  %s421, 1024, %s3, [#allocation5], 512, 512, 32
    $region33: #{tpu_custom_call.1} parent=1 // pred_fallthru
      _
    // Predicated region
    $region34: #{tpu_custom_call.1} parent=1 // pred_check
      _
    $region35: #{tpu_custom_call.1} parent=1 // pred_check_branch
      %428 = sbr.rel (0) target = $region37
    $region36: #{tpu_custom_call.1} parent=1 // pred_region
      %429 = dma.done [#allocation5], 1024
    $region37: #{tpu_custom_call.1} parent=1 // pred_fallthru
      _
    %430 = vsyncpa [#allocation4], 1
    %431 = vsyncpa [#allocation7], 1
    %432 = vsyncpa [#allocation5], 1

</llo_original>
